<compile_context>
chip_gen: v5e
topology: v5e:2x2
jax: 0.10.0
libtpu: 0.0.40
codegen_flags: <defaults>
</compile_context>

<pallas_src>
import functools

import jax
import jax.numpy as jnp
from jax.experimental import pallas as pl
from jax.experimental.pallas import tpu as pltpu


# ----------------------------------------------------------------------------
# Pallas kernel: fused MLP autoencoder forward
# (natural [batch, feat] I/O, lane-dense [feat, TILE_B] compute layout)
# ----------------------------------------------------------------------------
def _autoencoder_kernel(
    x_ref,                                   # [TILE_B, input_dim]
    w1, b1, w2, b2, w3, b3,                  # encoder hidden layers (BN folded)
    wz, bz,                                  # latent Linear(+BN)   -> z output
    w45, b45,                                # latent+decoder-first Linear fused
    w6, b6, w7, b7, w8, b8,                  # remaining decoder (last = plain Linear)
    x_recon_ref, z_ref,                      # [TILE_B, input_dim], [TILE_B, latent_dim]
    *, compute_dtype,
):
    def layer(h, w_r, b_r, relu):
        # W^T @ H on the MXU (f32 accumulation); bias-add / ReLU on the VPU in f32.
        y = jnp.dot(w_r[...], h, preferred_element_type=jnp.float32) + b_r[...]
        if relu:
            y = jnp.maximum(y, 0.0)
        return y

    # Layout change to lane-dense [features, TILE_B] on the idle XLU.
    h = x_ref[...].T.astype(compute_dtype)
    # ---- encoder: 3x Linear(+BN folded) -> ReLU  (Dropout = identity, eval) ----
    h = layer(h, w1, b1, True).astype(compute_dtype)
    h = layer(h, w2, b2, True).astype(compute_dtype)
    h3 = layer(h, w3, b3, True).astype(compute_dtype)
    # ---- latent projection: Linear(+BN folded), no activation ----
    z = layer(h3, wz, bz, False)                       # [latent, TILE_B] f32
    z_ref[...] = z.T.astype(z_ref.dtype)               # natural [TILE_B, latent]
    # ---- decoder: first layer fused with latent projection, then 2 more ----
    h = layer(h3, w45, b45, True).astype(compute_dtype)
    h = layer(h, w6, b6, True).astype(compute_dtype)
    h = layer(h, w7, b7, True).astype(compute_dtype)
    # ---- output reconstruction: plain Linear ----
    y = layer(h, w8, b8, False)                        # [input_dim, TILE_B] f32
    x_recon_ref[...] = y.T.astype(x_recon_ref.dtype)   # natural [TILE_B, input_dim]


def _round_up(n, m):
    return ((n + m - 1) // m) * m


def autoencoder_forward(x, params, *, tile_b=8192, compute_dtype=jnp.bfloat16):
    """Fused autoencoder forward.

    x: [batch, input_dim] float array (any float dtype; cast in-kernel).
    params: list of 8 (W [in, out], b [out]) pairs with BN already folded.
    tile_b: max batch tile. Real VMEM use is only a few MiB even at 8192-16384,
            so big tiles are safe on all of v5e/v6e/v7x; the wrapper clamps it
            for small batches and keeps >= 2 grid steps for v7x's two cores.
    compute_dtype: jnp.bfloat16 (default) or jnp.float32 for the MXU inputs;
            accumulation, bias-add, ReLU and both outputs are always f32.
            Note: in bf16 mode x_recon is computed from a bf16-rounded copy of
            the encoder activations, while z itself is returned in f32.
    """
    batch, input_dim = x.shape
    latent_dim = params[3][0].shape[1]

    # ---- fold latent Linear(+BN) into the decoder's first Linear(+BN) ----
    # (no nonlinearity between them:  ReLU(W5^T z + b5) = ReLU((W4 W5)^T h3 + ...))
    w4, b4 = params[3]
    w5, b5 = params[4]
    w45 = jnp.asarray(w4, jnp.float32) @ jnp.asarray(w5, jnp.float32)
    b45 = jnp.asarray(b4, jnp.float32) @ jnp.asarray(w5, jnp.float32) + jnp.asarray(b5, jnp.float32)
    layer_params = list(params[:4]) + [(w45, b45)] + list(params[5:])

    # ---- batch tiling: clamp for small batches, >= 2 tiles for v7x megacore ----
    tb = min(int(tile_b), _round_up(batch, 8))
    if batch >= 512:
        tb = min(tb, _round_up(pl.cdiv(batch, 2), 256))
    tb = max(8, _round_up(tb, 8))
    n_tiles = pl.cdiv(batch, tb)   # ragged final block handled by Pallas masking

    flat_params = []
    in_specs = [pl.BlockSpec((tb, input_dim), lambda i: (i, 0))]  # x, natural layout
    for w, b in layer_params:
        wT = jnp.asarray(w).T.astype(compute_dtype)               # [out, in]
        bc = jnp.asarray(b).reshape(-1, 1).astype(jnp.float32)    # [out, 1]
        flat_params.append(wT)
        flat_params.append(bc)
        # Constant index_map -> weights/biases stay resident in VMEM across steps.
        in_specs.append(pl.BlockSpec(wT.shape, lambda i: (0, 0)))
        in_specs.append(pl.BlockSpec(bc.shape, lambda i: (0, 0)))

    flops = 2 * batch * sum(int(w.shape[0]) * int(w.shape[1]) for w, _ in layer_params)
    bytes_accessed = (
        x.size * x.dtype.itemsize
        + sum(a.size * a.dtype.itemsize for a in flat_params)
        + batch * (input_dim + latent_dim) * 4  # f32 outputs
    )

    x_recon, z = pl.pallas_call(
        functools.partial(_autoencoder_kernel, compute_dtype=compute_dtype),
        grid=(n_tiles,),
        in_specs=in_specs,
        out_specs=(
            pl.BlockSpec((tb, input_dim), lambda i: (i, 0)),
            pl.BlockSpec((tb, latent_dim), lambda i: (i, 0)),
        ),
        out_shape=(
            jax.ShapeDtypeStruct((batch, input_dim), jnp.float32),
            jax.ShapeDtypeStruct((batch, latent_dim), jnp.float32),
        ),
        compiler_params=pltpu.CompilerParams(
            dimension_semantics=("parallel",),        # megacore sharding on v7x
            vmem_limit_bytes=32 * 1024 * 1024,        # plenty; safe on 64 MiB v7x
        ),
        cost_estimate=pl.CostEstimate(
            flops=flops, transcendentals=0, bytes_accessed=bytes_accessed),
    )(x, *flat_params)

    return x_recon, z


# ----------------------------------------------------------------------------
# Deterministic parameter construction (mirrors nn.Linear / nn.BatchNorm1d init)
# ----------------------------------------------------------------------------
def _make_linear(key, in_dim, out_dim):
    """PyTorch-style uniform(-1/sqrt(fan_in), 1/sqrt(fan_in)) init."""
    kw, kb = jax.random.split(key)
    bound = 1.0 / jnp.sqrt(jnp.float32(in_dim))
    w = jax.random.uniform(kw, (in_dim, out_dim), jnp.float32, -bound, bound)
    b = jax.random.uniform(kb, (out_dim,), jnp.float32, -bound, bound)
    return w, b


def _fold_bn(w, b, out_dim, eps=1e-5):
    """Fold an eval-mode BatchNorm1d (init state) into the preceding Linear."""
    gamma = jnp.ones((out_dim,), jnp.float32)
    beta = jnp.zeros((out_dim,), jnp.float32)
    running_mean = jnp.zeros((out_dim,), jnp.float32)
    running_var = jnp.ones((out_dim,), jnp.float32)
    scale = gamma / jnp.sqrt(running_var + eps)
    shift = beta - running_mean * scale
    return w * scale[None, :], b * scale + shift


def build_params(key, input_dim, hidden_dims, latent_dim):
    dims = []
    cur = input_dim
    for h in hidden_dims:                              # encoder
        dims.append((cur, h, True))                    # Linear + BN + ReLU
        cur = h
    dims.append((hidden_dims[-1], latent_dim, True))   # Linear + BN (latent)
    cur = latent_dim
    for h in reversed(hidden_dims):                    # decoder
        dims.append((cur, h, True))                    # Linear + BN + ReLU
        cur = h
    dims.append((hidden_dims[0], input_dim, False))    # final plain Linear

    params = []
    keys = jax.random.split(key, len(dims))
    for k, (din, dout, has_bn) in zip(keys, dims):
        w, b = _make_linear(k, din, dout)
        if has_bn:
            w, b = _fold_bn(w, b, dout)
        params.append((w, b))
    return params


# ----------------------------------------------------------------------------
# Pure-JAX reference for correctness check
# ----------------------------------------------------------------------------
def reference_forward(x, params):
    h = x
    for (w, b) in params[:3]:
        h = jnp.maximum(h @ w + b, 0.0)
    z = h @ params[3][0] + params[3][1]
    h = z
    for (w, b) in params[4:7]:
        h = jnp.maximum(h @ w + b, 0.0)
    x_recon = h @ params[7][0] + params[7][1]
    return x_recon, z


if __name__ == "__main__":
    input_dim = 32
    hidden_dims = [64, 32, 16]
    latent_dim = 8

    root = jax.random.PRNGKey(0)
    k_x1, k_x2, k_p = jax.random.split(root, 3)
    params = build_params(k_p, input_dim, hidden_dims, latent_dim)

    # --- small batch: single grid step, exact f32 math ---
    batch1 = 16
    x1 = jax.random.normal(k_x1, (batch1, input_dim), jnp.float32)
    x_recon1, z1 = autoencoder_forward(x1, params, compute_dtype=jnp.float32)
    jax.block_until_ready((x_recon1, z1))
    x_recon1_ref, z1_ref = reference_forward(x1, params)
    assert x_recon1.shape == (batch1, input_dim)
    assert z1.shape == (batch1, latent_dim)
    assert jnp.allclose(x_recon1, x_recon1_ref, atol=1e-4, rtol=1e-4)
    assert jnp.allclose(z1, z1_ref, atol=1e-4, rtol=1e-4)

    # --- larger batch: 2-step grid with a ragged final block, f32 math ---
    batch2 = 600
    x2 = jax.random.normal(k_x2, (batch2, input_dim), jnp.float32)
    x_recon2, z2 = autoencoder_forward(x2, params, compute_dtype=jnp.float32)
    jax.block_until_ready((x_recon2, z2))
    x_recon2_ref, z2_ref = reference_forward(x2, params)
    assert x_recon2.shape == (batch2, input_dim)
    assert z2.shape == (batch2, latent_dim)
    assert jnp.allclose(x_recon2, x_recon2_ref, atol=1e-4, rtol=1e-4)
    assert jnp.allclose(z2, z2_ref, atol=1e-4, rtol=1e-4)

    # --- default bf16 compute path (f32 accumulation / outputs): loose check ---
    x_recon_bf, z_bf = autoencoder_forward(x2, params)   # compute_dtype=bfloat16
    jax.block_until_ready((x_recon_bf, z_bf))
    assert x_recon_bf.shape == (batch2, input_dim)
    assert z_bf.shape == (batch2, latent_dim)
    assert bool(jnp.all(jnp.isfinite(x_recon_bf))) and bool(jnp.all(jnp.isfinite(z_bf)))
    assert jnp.allclose(x_recon_bf, x_recon2_ref, atol=1e-1, rtol=1e-1)
    assert jnp.allclose(z_bf, z2_ref, atol=1e-1, rtol=1e-1)

    print("KERNEL_OK")
</pallas_src>

<mosaic_0001>
module attributes {stable_mosaic.version = 11 : i64} {
  func.func @_autoencoder_kernel(%arg0: i32, %arg1: memref<16x32xf32, #tpu.memory_space<vmem>>, %arg2: memref<64x32xf32, #tpu.memory_space<vmem>>, %arg3: memref<64x1xf32, #tpu.memory_space<vmem>>, %arg4: memref<32x64xf32, #tpu.memory_space<vmem>>, %arg5: memref<32x1xf32, #tpu.memory_space<vmem>>, %arg6: memref<16x32xf32, #tpu.memory_space<vmem>>, %arg7: memref<16x1xf32, #tpu.memory_space<vmem>>, %arg8: memref<8x16xf32, #tpu.memory_space<vmem>>, %arg9: memref<8x1xf32, #tpu.memory_space<vmem>>, %arg10: memref<16x16xf32, #tpu.memory_space<vmem>>, %arg11: memref<16x1xf32, #tpu.memory_space<vmem>>, %arg12: memref<32x16xf32, #tpu.memory_space<vmem>>, %arg13: memref<32x1xf32, #tpu.memory_space<vmem>>, %arg14: memref<64x32xf32, #tpu.memory_space<vmem>>, %arg15: memref<64x1xf32, #tpu.memory_space<vmem>>, %arg16: memref<32x64xf32, #tpu.memory_space<vmem>>, %arg17: memref<32x1xf32, #tpu.memory_space<vmem>>, %arg18: memref<16x32xf32, #tpu.memory_space<vmem>>, %arg19: memref<16x8xf32, #tpu.memory_space<vmem>>) attributes {dimension_semantics = [#tpu.dimension_semantics<parallel>], iteration_bounds = array<i64: 1>, scalar_prefetch = 0 : i64, scratch_operands = 0 : i64, tpu.core_type = #tpu.core_type<tc>, window_params = [{transform_indices = @transform_0, window_bounds = array<i64: 16, 32>}, {pipeline_mode = #tpu.pipeline_mode<synchronous>, transform_indices = @transform_1, window_bounds = array<i64: 64, 32>}, {pipeline_mode = #tpu.pipeline_mode<synchronous>, transform_indices = @transform_2, window_bounds = array<i64: 64, 1>}, {pipeline_mode = #tpu.pipeline_mode<synchronous>, transform_indices = @transform_3, window_bounds = array<i64: 32, 64>}, {pipeline_mode = #tpu.pipeline_mode<synchronous>, transform_indices = @transform_4, window_bounds = array<i64: 32, 1>}, {pipeline_mode = #tpu.pipeline_mode<synchronous>, transform_indices = @transform_5, window_bounds = array<i64: 16, 32>}, {pipeline_mode = #tpu.pipeline_mode<synchronous>, transform_indices = @transform_6, window_bounds = array<i64: 16, 1>}, {pipeline_mode = #tpu.pipeline_mode<synchronous>, transform_indices = @transform_7, window_bounds = array<i64: 8, 16>}, {pipeline_mode = #tpu.pipeline_mode<synchronous>, transform_indices = @transform_8, window_bounds = array<i64: 8, 1>}, {pipeline_mode = #tpu.pipeline_mode<synchronous>, transform_indices = @transform_9, window_bounds = array<i64: 16, 16>}, {pipeline_mode = #tpu.pipeline_mode<synchronous>, transform_indices = @transform_10, window_bounds = array<i64: 16, 1>}, {pipeline_mode = #tpu.pipeline_mode<synchronous>, transform_indices = @transform_11, window_bounds = array<i64: 32, 16>}, {pipeline_mode = #tpu.pipeline_mode<synchronous>, transform_indices = @transform_12, window_bounds = array<i64: 32, 1>}, {pipeline_mode = #tpu.pipeline_mode<synchronous>, transform_indices = @transform_13, window_bounds = array<i64: 64, 32>}, {pipeline_mode = #tpu.pipeline_mode<synchronous>, transform_indices = @transform_14, window_bounds = array<i64: 64, 1>}, {pipeline_mode = #tpu.pipeline_mode<synchronous>, transform_indices = @transform_15, window_bounds = array<i64: 32, 64>}, {pipeline_mode = #tpu.pipeline_mode<synchronous>, transform_indices = @transform_16, window_bounds = array<i64: 32, 1>}, {transform_indices = @transform_17, window_bounds = array<i64: 16, 32>}, {transform_indices = @transform_18, window_bounds = array<i64: 16, 8>}]} {
    %c0 = arith.constant 0 : index
    %c0_0 = arith.constant 0 : index
    %0 = vector.load %arg1[%c0, %c0_0] : memref<16x32xf32, #tpu.memory_space<vmem>>, vector<16x32xf32>
    %1 = tpu.transpose %0, [1, 0] : vector<16x32xf32> -> vector<32x16xf32>
    %c0_1 = arith.constant 0 : index
    %c0_2 = arith.constant 0 : index
    %2 = vector.load %arg2[%c0_1, %c0_2] : memref<64x32xf32, #tpu.memory_space<vmem>>, vector<64x32xf32>
    %cst = arith.constant dense<0.000000e+00> : vector<64x16xf32>
    %3 = tpu.matmul %2, %1, %cst {dimension_numbers = #tpu.dot_dimension_numbers<[1], [0], [0], [1], [0, 0, 1, 1], [], []>} : vector<64x32xf32>, vector<32x16xf32>, vector<64x16xf32> -> vector<64x16xf32>
    %c0_3 = arith.constant 0 : index
    %c0_4 = arith.constant 0 : index
    %4 = vector.load %arg3[%c0_3, %c0_4] : memref<64x1xf32, #tpu.memory_space<vmem>>, vector<64x1xf32>
    %5 = vector.broadcast %4 : vector<64x1xf32> to vector<64x16xf32>
    %6 = arith.addf %3, %5 : vector<64x16xf32>
    %cst_5 = arith.constant 0.000000e+00 : f32
    %7 = vector.broadcast %cst_5 : f32 to vector<64x16xf32>
    %8 = arith.maximumf %6, %7 : vector<64x16xf32>
    %c0_6 = arith.constant 0 : index
    %c0_7 = arith.constant 0 : index
    %9 = vector.load %arg4[%c0_6, %c0_7] : memref<32x64xf32, #tpu.memory_space<vmem>>, vector<32x64xf32>
    %cst_8 = arith.constant dense<0.000000e+00> : vector<32x16xf32>
    %10 = tpu.matmul %9, %8, %cst_8 {dimension_numbers = #tpu.dot_dimension_numbers<[1], [0], [0], [1], [0, 0, 1, 1], [], []>} : vector<32x64xf32>, vector<64x16xf32>, vector<32x16xf32> -> vector<32x16xf32>
    %c0_9 = arith.constant 0 : index
    %c0_10 = arith.constant 0 : index
    %11 = vector.load %arg5[%c0_9, %c0_10] : memref<32x1xf32, #tpu.memory_space<vmem>>, vector<32x1xf32>
    %12 = vector.broadcast %11 : vector<32x1xf32> to vector<32x16xf32>
    %13 = arith.addf %10, %12 : vector<32x16xf32>
    %cst_11 = arith.constant 0.000000e+00 : f32
    %14 = vector.broadcast %cst_11 : f32 to vector<32x16xf32>
    %15 = arith.maximumf %13, %14 : vector<32x16xf32>
    %c0_12 = arith.constant 0 : index
    %c0_13 = arith.constant 0 : index
    %16 = vector.load %arg6[%c0_12, %c0_13] : memref<16x32xf32, #tpu.memory_space<vmem>>, vector<16x32xf32>
    %cst_14 = arith.constant dense<0.000000e+00> : vector<16x16xf32>
    %17 = tpu.matmul %16, %15, %cst_14 {dimension_numbers = #tpu.dot_dimension_numbers<[1], [0], [0], [1], [0, 0, 1, 1], [], []>} : vector<16x32xf32>, vector<32x16xf32>, vector<16x16xf32> -> vector<16x16xf32>
    %c0_15 = arith.constant 0 : index
    %c0_16 = arith.constant 0 : index
    %18 = vector.load %arg7[%c0_15, %c0_16] : memref<16x1xf32, #tpu.memory_space<vmem>>, vector<16x1xf32>
    %19 = vector.broadcast %18 : vector<16x1xf32> to vector<16x16xf32>
    %20 = arith.addf %17, %19 : vector<16x16xf32>
    %cst_17 = arith.constant 0.000000e+00 : f32
    %21 = vector.broadcast %cst_17 : f32 to vector<16x16xf32>
    %22 = arith.maximumf %20, %21 : vector<16x16xf32>
    %c0_18 = arith.constant 0 : index
    %c0_19 = arith.constant 0 : index
    %23 = vector.load %arg8[%c0_18, %c0_19] : memref<8x16xf32, #tpu.memory_space<vmem>>, vector<8x16xf32>
    %cst_20 = arith.constant dense<0.000000e+00> : vector<8x16xf32>
    %24 = tpu.matmul %23, %22, %cst_20 {dimension_numbers = #tpu.dot_dimension_numbers<[1], [0], [0], [1], [0, 0, 1, 1], [], []>} : vector<8x16xf32>, vector<16x16xf32>, vector<8x16xf32> -> vector<8x16xf32>
    %c0_21 = arith.constant 0 : index
    %c0_22 = arith.constant 0 : index
    %25 = vector.load %arg9[%c0_21, %c0_22] : memref<8x1xf32, #tpu.memory_space<vmem>>, vector<8x1xf32>
    %26 = vector.broadcast %25 : vector<8x1xf32> to vector<8x16xf32>
    %27 = arith.addf %24, %26 : vector<8x16xf32>
    %28 = tpu.transpose %27, [1, 0] : vector<8x16xf32> -> vector<16x8xf32>
    %c0_23 = arith.constant 0 : index
    %c0_24 = arith.constant 0 : index
    %29 = vector.load %arg19[%c0_23, %c0_24] : memref<16x8xf32, #tpu.memory_space<vmem>>, vector<16x8xf32>
    tpu.vector_store %arg19[%c0_23, %c0_24], %28 {strides = array<i32>} : memref<16x8xf32, #tpu.memory_space<vmem>>, vector<16x8xf32>,
    %c0_25 = arith.constant 0 : index
    %c0_26 = arith.constant 0 : index
    %30 = vector.load %arg10[%c0_25, %c0_26] : memref<16x16xf32, #tpu.memory_space<vmem>>, vector<16x16xf32>
    %cst_27 = arith.constant dense<0.000000e+00> : vector<16x16xf32>
    %31 = tpu.matmul %30, %22, %cst_27 {dimension_numbers = #tpu.dot_dimension_numbers<[1], [0], [0], [1], [0, 0, 1, 1], [], []>} : vector<16x16xf32>, vector<16x16xf32>, vector<16x16xf32> -> vector<16x16xf32>
    %c0_28 = arith.constant 0 : index
    %c0_29 = arith.constant 0 : index
    %32 = vector.load %arg11[%c0_28, %c0_29] : memref<16x1xf32, #tpu.memory_space<vmem>>, vector<16x1xf32>
    %33 = vector.broadcast %32 : vector<16x1xf32> to vector<16x16xf32>
    %34 = arith.addf %31, %33 : vector<16x16xf32>
    %cst_30 = arith.constant 0.000000e+00 : f32
    %35 = vector.broadcast %cst_30 : f32 to vector<16x16xf32>
    %36 = arith.maximumf %34, %35 : vector<16x16xf32>
    %c0_31 = arith.constant 0 : index
    %c0_32 = arith.constant 0 : index
    %37 = vector.load %arg12[%c0_31, %c0_32] : memref<32x16xf32, #tpu.memory_space<vmem>>, vector<32x16xf32>
    %cst_33 = arith.constant dense<0.000000e+00> : vector<32x16xf32>
    %38 = tpu.matmul %37, %36, %cst_33 {dimension_numbers = #tpu.dot_dimension_numbers<[1], [0], [0], [1], [0, 0, 1, 1], [], []>} : vector<32x16xf32>, vector<16x16xf32>, vector<32x16xf32> -> vector<32x16xf32>
    %c0_34 = arith.constant 0 : index
    %c0_35 = arith.constant 0 : index
    %39 = vector.load %arg13[%c0_34, %c0_35] : memref<32x1xf32, #tpu.memory_space<vmem>>, vector<32x1xf32>
    %40 = vector.broadcast %39 : vector<32x1xf32> to vector<32x16xf32>
    %41 = arith.addf %38, %40 : vector<32x16xf32>
    %cst_36 = arith.constant 0.000000e+00 : f32
    %42 = vector.broadcast %cst_36 : f32 to vector<32x16xf32>
    %43 = arith.maximumf %41, %42 : vector<32x16xf32>
    %c0_37 = arith.constant 0 : index
    %c0_38 = arith.constant 0 : index
    %44 = vector.load %arg14[%c0_37, %c0_38] : memref<64x32xf32, #tpu.memory_space<vmem>>, vector<64x32xf32>
    %cst_39 = arith.constant dense<0.000000e+00> : vector<64x16xf32>
    %45 = tpu.matmul %44, %43, %cst_39 {dimension_numbers = #tpu.dot_dimension_numbers<[1], [0], [0], [1], [0, 0, 1, 1], [], []>} : vector<64x32xf32>, vector<32x16xf32>, vector<64x16xf32> -> vector<64x16xf32>
    %c0_40 = arith.constant 0 : index
    %c0_41 = arith.constant 0 : index
    %46 = vector.load %arg15[%c0_40, %c0_41] : memref<64x1xf32, #tpu.memory_space<vmem>>, vector<64x1xf32>
    %47 = vector.broadcast %46 : vector<64x1xf32> to vector<64x16xf32>
    %48 = arith.addf %45, %47 : vector<64x16xf32>
    %cst_42 = arith.constant 0.000000e+00 : f32
    %49 = vector.broadcast %cst_42 : f32 to vector<64x16xf32>
    %50 = arith.maximumf %48, %49 : vector<64x16xf32>
    %c0_43 = arith.constant 0 : index
    %c0_44 = arith.constant 0 : index
    %51 = vector.load %arg16[%c0_43, %c0_44] : memref<32x64xf32, #tpu.memory_space<vmem>>, vector<32x64xf32>
    %cst_45 = arith.constant dense<0.000000e+00> : vector<32x16xf32>
    %52 = tpu.matmul %51, %50, %cst_45 {dimension_numbers = #tpu.dot_dimension_numbers<[1], [0], [0], [1], [0, 0, 1, 1], [], []>} : vector<32x64xf32>, vector<64x16xf32>, vector<32x16xf32> -> vector<32x16xf32>
    %c0_46 = arith.constant 0 : index
    %c0_47 = arith.constant 0 : index
    %53 = vector.load %arg17[%c0_46, %c0_47] : memref<32x1xf32, #tpu.memory_space<vmem>>, vector<32x1xf32>
    %54 = vector.broadcast %53 : vector<32x1xf32> to vector<32x16xf32>
    %55 = arith.addf %52, %54 : vector<32x16xf32>
    %56 = tpu.transpose %55, [1, 0] : vector<32x16xf32> -> vector<16x32xf32>
    %c0_48 = arith.constant 0 : index
    %c0_49 = arith.constant 0 : index
    %57 = vector.load %arg18[%c0_48, %c0_49] : memref<16x32xf32, #tpu.memory_space<vmem>>, vector<16x32xf32>
    tpu.vector_store %arg18[%c0_48, %c0_49], %56 {strides = array<i32>} : memref<16x32xf32, #tpu.memory_space<vmem>>, vector<16x32xf32>,
    return
  }
  func.func @transform_0(%arg0: i32) -> (i32, i32) {
    %c0_i32 = arith.constant 0 : i32
    %c0_i32_0 = arith.constant 0 : i32
    return %arg0, %c0_i32 : i32, i32
  }
  func.func @transform_1(%arg0: i32) -> (i32, i32) {
    %c0_i32 = arith.constant 0 : i32
    %c0_i32_0 = arith.constant 0 : i32
    %c0_i32_1 = arith.constant 0 : i32
    return %c0_i32, %c0_i32_0 : i32, i32
  }
  func.func @transform_2(%arg0: i32) -> (i32, i32) {
    %c0_i32 = arith.constant 0 : i32
    %c0_i32_0 = arith.constant 0 : i32
    %c0_i32_1 = arith.constant 0 : i32
    return %c0_i32, %c0_i32_0 : i32, i32
  }
  func.func @transform_3(%arg0: i32) -> (i32, i32) {
    %c0_i32 = arith.constant 0 : i32
    %c0_i32_0 = arith.constant 0 : i32
    %c0_i32_1 = arith.constant 0 : i32
    return %c0_i32, %c0_i32_0 : i32, i32
  }
  func.func @transform_4(%arg0: i32) -> (i32, i32) {
    %c0_i32 = arith.constant 0 : i32
    %c0_i32_0 = arith.constant 0 : i32
    %c0_i32_1 = arith.constant 0 : i32
    return %c0_i32, %c0_i32_0 : i32, i32
  }
  func.func @transform_5(%arg0: i32) -> (i32, i32) {
    %c0_i32 = arith.constant 0 : i32
    %c0_i32_0 = arith.constant 0 : i32
    %c0_i32_1 = arith.constant 0 : i32
    return %c0_i32, %c0_i32_0 : i32, i32
  }
  func.func @transform_6(%arg0: i32) -> (i32, i32) {
    %c0_i32 = arith.constant 0 : i32
    %c0_i32_0 = arith.constant 0 : i32
    %c0_i32_1 = arith.constant 0 : i32
    return %c0_i32, %c0_i32_0 : i32, i32
  }
  func.func @transform_7(%arg0: i32) -> (i32, i32) {
    %c0_i32 = arith.constant 0 : i32
    %c0_i32_0 = arith.constant 0 : i32
    %c0_i32_1 = arith.constant 0 : i32
    return %c0_i32, %c0_i32_0 : i32, i32
  }
  func.func @transform_8(%arg0: i32) -> (i32, i32) {
    %c0_i32 = arith.constant 0 : i32
    %c0_i32_0 = arith.constant 0 : i32
    %c0_i32_1 = arith.constant 0 : i32
    return %c0_i32, %c0_i32_0 : i32, i32
  }
  func.func @transform_9(%arg0: i32) -> (i32, i32) {
    %c0_i32 = arith.constant 0 : i32
    %c0_i32_0 = arith.constant 0 : i32
    %c0_i32_1 = arith.constant 0 : i32
    return %c0_i32, %c0_i32_0 : i32, i32
  }
  func.func @transform_10(%arg0: i32) -> (i32, i32) {
    %c0_i32 = arith.constant 0 : i32
    %c0_i32_0 = arith.constant 0 : i32
    %c0_i32_1 = arith.constant 0 : i32
    return %c0_i32, %c0_i32_0 : i32, i32
  }
  func.func @transform_11(%arg0: i32) -> (i32, i32) {
    %c0_i32 = arith.constant 0 : i32
    %c0_i32_0 = arith.constant 0 : i32
    %c0_i32_1 = arith.constant 0 : i32
    return %c0_i32, %c0_i32_0 : i32, i32
  }
  func.func @transform_12(%arg0: i32) -> (i32, i32) {
    %c0_i32 = arith.constant 0 : i32
    %c0_i32_0 = arith.constant 0 : i32
    %c0_i32_1 = arith.constant 0 : i32
    return %c0_i32, %c0_i32_0 : i32, i32
  }
  func.func @transform_13(%arg0: i32) -> (i32, i32) {
    %c0_i32 = arith.constant 0 : i32
    %c0_i32_0 = arith.constant 0 : i32
    %c0_i32_1 = arith.constant 0 : i32
    return %c0_i32, %c0_i32_0 : i32, i32
  }
  func.func @transform_14(%arg0: i32) -> (i32, i32) {
    %c0_i32 = arith.constant 0 : i32
    %c0_i32_0 = arith.constant 0 : i32
    %c0_i32_1 = arith.constant 0 : i32
    return %c0_i32, %c0_i32_0 : i32, i32
  }
  func.func @transform_15(%arg0: i32) -> (i32, i32) {
    %c0_i32 = arith.constant 0 : i32
    %c0_i32_0 = arith.constant 0 : i32
    %c0_i32_1 = arith.constant 0 : i32
    return %c0_i32, %c0_i32_0 : i32, i32
  }
  func.func @transform_16(%arg0: i32) -> (i32, i32) {
    %c0_i32 = arith.constant 0 : i32
    %c0_i32_0 = arith.constant 0 : i32
    %c0_i32_1 = arith.constant 0 : i32
    return %c0_i32, %c0_i32_0 : i32, i32
  }
  func.func @transform_17(%arg0: i32) -> (i32, i32) {
    %c0_i32 = arith.constant 0 : i32
    %c0_i32_0 = arith.constant 0 : i32
    return %arg0, %c0_i32 : i32, i32
  }
  func.func @transform_18(%arg0: i32) -> (i32, i32) {
    %c0_i32 = arith.constant 0 : i32
    %c0_i32_0 = arith.constant 0 : i32
    return %arg0, %c0_i32 : i32, i32
  }
}

</mosaic_0001>

<llo_original>
// kernel: tpu_custom_call.1
$region0: #{tpu_custom_call.1}
  #allocation0 [shape = 'u32[]', space=smem, size = 0x4, offset = 0x4, fixed_abs, tag = 'smem constant byte address 0x4 - core index']
  #allocation1 [shape = 'u32[72,128]{1,0:T(1,128)}', space=vmem, size = 0x9000, scoped, tag = 'internal scratch']
  %s0 = inlined_call_operand.vmem [shape: f32[16,32], index: 0, kind: input, shape index: {}]
  %s1 = inlined_call_operand.vmem [shape: f32[64,32], index: 1, kind: input, shape index: {}]
  %s2 = inlined_call_operand.vmem [shape: f32[64,1], index: 2, kind: input, shape index: {}]
  %s3 = inlined_call_operand.vmem [shape: f32[32,64], index: 3, kind: input, shape index: {}]
  %s4 = inlined_call_operand.vmem [shape: f32[32,1], index: 4, kind: input, shape index: {}]
  %s5 = inlined_call_operand.vmem [shape: f32[16,32], index: 5, kind: input, shape index: {}]
  %s6 = inlined_call_operand.vmem [shape: f32[16,1], index: 6, kind: input, shape index: {}]
  %s7 = inlined_call_operand.vmem [shape: f32[8,16], index: 7, kind: input, shape index: {}]
  %s8 = inlined_call_operand.vmem [shape: f32[8,1], index: 8, kind: input, shape index: {}]
  %s9 = inlined_call_operand.vmem [shape: f32[16,16], index: 9, kind: input, shape index: {}]
  %s10 = inlined_call_operand.vmem [shape: f32[16,1], index: 10, kind: input, shape index: {}]
  %s11 = inlined_call_operand.vmem [shape: f32[32,16], index: 11, kind: input, shape index: {}]
  %s12 = inlined_call_operand.vmem [shape: f32[32,1], index: 12, kind: input, shape index: {}]
  %s13 = inlined_call_operand.vmem [shape: f32[64,32], index: 13, kind: input, shape index: {}]
  %s14 = inlined_call_operand.vmem [shape: f32[64,1], index: 14, kind: input, shape index: {}]
  %s15 = inlined_call_operand.vmem [shape: f32[32,64], index: 15, kind: input, shape index: {}]
  %s16 = inlined_call_operand.vmem [shape: f32[32,1], index: 16, kind: input, shape index: {}]
  %s17 = inlined_call_operand.hbm [shape: f32[16,32], index: 17, kind: output, shape index: {0}]
  %s18 = inlined_call_operand.vmem [shape: f32[16,8], index: 18, kind: output, shape index: {1}]
  %19 = xla_tuple %s17, %s18
  %s20 = sld [smem:[#allocation0]]
  $region86: #{tpu_custom_call.1} parent=0
    _
  %s22 = ssub.s32 1, %s20
  %s23 = scalar_select 0, %s22, %s20
  $region1: #{tpu_custom_call.1} parent=0
    #allocation2 [shape = 'u8[8192]{0}', space=vmem, size = 0x2000, scoped, tag = 'output window, operand 0, single buffered']
    #allocation3 [shape = 's32[1]{0}', space=sflag, size = 0x4, scoped, tag = 'scoped memory for tpu_custom_call.1']
    %24 = vsyncpa [#allocation3], 0
    // Predicated region
    $region2: #{tpu_custom_call.1} parent=1 // pred_check
      _
    $region3: #{tpu_custom_call.1} parent=1 // pred_check_branch
      %26 = sbr.rel (0) target = $region5
    $region4: #{tpu_custom_call.1} parent=1 // pred_region
      _
    $region5: #{tpu_custom_call.1} parent=1 // pred_fallthru
      _
    // Predicated region
    $region6: #{tpu_custom_call.1} parent=1 // pred_check
      _
    $region7: #{tpu_custom_call.1} parent=1 // pred_check_branch
      %28 = sbr.rel (0) target = $region9
    $region8: #{tpu_custom_call.1} parent=1 // pred_region
      _
    $region9: #{tpu_custom_call.1} parent=1 // pred_fallthru
      _
    // Predicated region
    $region10: #{tpu_custom_call.1} parent=1 // pred_check
      _
    $region11: #{tpu_custom_call.1} parent=1 // pred_check_branch
      %30 = sbr.rel (0) target = $region13
    $region12: #{tpu_custom_call.1} parent=1 // pred_region
      _
    $region13: #{tpu_custom_call.1} parent=1 // pred_fallthru
      _
    // Predicated region
    $region14: #{tpu_custom_call.1} parent=1 // pred_check
      _
    $region15: #{tpu_custom_call.1} parent=1 // pred_check_branch
      %32 = sbr.rel (0) target = $region17
    $region16: #{tpu_custom_call.1} parent=1 // pred_region
      _
    $region17: #{tpu_custom_call.1} parent=1 // pred_fallthru
      _
    // Predicated region
    $region18: #{tpu_custom_call.1} parent=1 // pred_check
      _
    $region19: #{tpu_custom_call.1} parent=1 // pred_check_branch
      %34 = sbr.rel (0) target = $region21
    $region20: #{tpu_custom_call.1} parent=1 // pred_region
      _
    $region21: #{tpu_custom_call.1} parent=1 // pred_fallthru
      _
    // Predicated region
    $region22: #{tpu_custom_call.1} parent=1 // pred_check
      _
    $region23: #{tpu_custom_call.1} parent=1 // pred_check_branch
      %36 = sbr.rel (0) target = $region25
    $region24: #{tpu_custom_call.1} parent=1 // pred_region
      _
    $region25: #{tpu_custom_call.1} parent=1 // pred_fallthru
      _
    // Predicated region
    $region26: #{tpu_custom_call.1} parent=1 // pred_check
      _
    $region27: #{tpu_custom_call.1} parent=1 // pred_check_branch
      %38 = sbr.rel (0) target = $region29
    $region28: #{tpu_custom_call.1} parent=1 // pred_region
      _
    $region29: #{tpu_custom_call.1} parent=1 // pred_fallthru
      _
    // Predicated region
    $region30: #{tpu_custom_call.1} parent=1 // pred_check
      _
    $region31: #{tpu_custom_call.1} parent=1 // pred_check_branch
      %40 = sbr.rel (0) target = $region33
    $region32: #{tpu_custom_call.1} parent=1 // pred_region
      _
    $region33: #{tpu_custom_call.1} parent=1 // pred_fallthru
      _
    // Predicated region
    $region34: #{tpu_custom_call.1} parent=1 // pred_check
      _
    $region35: #{tpu_custom_call.1} parent=1 // pred_check_branch
      %42 = sbr.rel (0) target = $region37
    $region36: #{tpu_custom_call.1} parent=1 // pred_region
      _
    $region37: #{tpu_custom_call.1} parent=1 // pred_fallthru
      _
    // Predicated region
    $region38: #{tpu_custom_call.1} parent=1 // pred_check
      _
    $region39: #{tpu_custom_call.1} parent=1 // pred_check_branch
      %44 = sbr.rel (0) target = $region41
    $region40: #{tpu_custom_call.1} parent=1 // pred_region
      _
    $region41: #{tpu_custom_call.1} parent=1 // pred_fallthru
      _
    // Predicated region
    $region42: #{tpu_custom_call.1} parent=1 // pred_check
      _
    $region43: #{tpu_custom_call.1} parent=1 // pred_check_branch
      %46 = sbr.rel (0) target = $region45
    $region44: #{tpu_custom_call.1} parent=1 // pred_region
      _
    $region45: #{tpu_custom_call.1} parent=1 // pred_fallthru
      _
    // Predicated region
    $region46: #{tpu_custom_call.1} parent=1 // pred_check
      _
    $region47: #{tpu_custom_call.1} parent=1 // pred_check_branch
      %48 = sbr.rel (0) target = $region49
    $region48: #{tpu_custom_call.1} parent=1 // pred_region
      _
    $region49: #{tpu_custom_call.1} parent=1 // pred_fallthru
      _
    // Predicated region
    $region50: #{tpu_custom_call.1} parent=1 // pred_check
      _
    $region51: #{tpu_custom_call.1} parent=1 // pred_check_branch
      %50 = sbr.rel (0) target = $region53
    $region52: #{tpu_custom_call.1} parent=1 // pred_region
      _
    $region53: #{tpu_custom_call.1} parent=1 // pred_fallthru
      _
    // Predicated region
    $region54: #{tpu_custom_call.1} parent=1 // pred_check
      _
    $region55: #{tpu_custom_call.1} parent=1 // pred_check_branch
      %52 = sbr.rel (0) target = $region57
    $region56: #{tpu_custom_call.1} parent=1 // pred_region
      _
    $region57: #{tpu_custom_call.1} parent=1 // pred_fallthru
      _
    // Predicated region
    $region58: #{tpu_custom_call.1} parent=1 // pred_check
      _
    $region59: #{tpu_custom_call.1} parent=1 // pred_check_branch
      %54 = sbr.rel (0) target = $region61
    $region60: #{tpu_custom_call.1} parent=1 // pred_region
      _
    $region61: #{tpu_custom_call.1} parent=1 // pred_fallthru
      _
    // Predicated region
    $region62: #{tpu_custom_call.1} parent=1 // pred_check
      _
    $region63: #{tpu_custom_call.1} parent=1 // pred_check_branch
      %56 = sbr.rel (0) target = $region65
    $region64: #{tpu_custom_call.1} parent=1 // pred_region
      _
    $region65: #{tpu_custom_call.1} parent=1 // pred_fallthru
      _
    // Predicated region
    $region66: #{tpu_custom_call.1} parent=1 // pred_check
      _
    $region67: #{tpu_custom_call.1} parent=1 // pred_check_branch
      %58 = sbr.rel (0) target = $region69
    $region68: #{tpu_custom_call.1} parent=1 // pred_region
      _
    $region69: #{tpu_custom_call.1} parent=1 // pred_fallthru
      _
    %v59 = vld [vmem:[%s0] sm:$0xff]
    %v60 = vld [vmem:[%s0 + $0x8] sm:$0xff]
    %v61 = vld [vmem:[%s1] sm:$0xff]
    %v62 = vld [vmem:[%s1 + $0x8] sm:$0xff]
    %v63 = vld [vmem:[%s1 + $0x10] sm:$0xff]
    %v64 = vld [vmem:[%s1 + $0x18] sm:$0xff]
    %v65 = vld [vmem:[%s1 + $0x20] sm:$0xff]
    %v66 = vld [vmem:[%s1 + $0x28] sm:$0xff]
    %v67 = vld [vmem:[%s1 + $0x30] sm:$0xff]
    %v68 = vld [vmem:[%s1 + $0x38] sm:$0xff]
    %v69 = vld [vmem:[%s2] sm:$0xff]
    %v70 = vld [vmem:[%s2 + $0x8] sm:$0xff]
    %v71 = vld [vmem:[%s2 + $0x10] sm:$0xff]
    %v72 = vld [vmem:[%s2 + $0x18] sm:$0xff]
    %v73 = vld [vmem:[%s2 + $0x20] sm:$0xff]
    %v74 = vld [vmem:[%s2 + $0x28] sm:$0xff]
    %v75 = vld [vmem:[%s2 + $0x30] sm:$0xff]
    %v76 = vld [vmem:[%s2 + $0x38] sm:$0xff]
    %78 = vset.pattern.permute.xlu0 0
    %79 = vperm.xlu0 %78, %v69
    %v80 = vpop.permute.xlu0 %79
    %83 = vset.pattern.permute.xlu0 0
    %84 = vperm.xlu0 %83, %v70
    %v85 = vpop.permute.xlu0 %84
    %88 = vset.pattern.permute.xlu0 0
    %89 = vperm.xlu0 %88, %v71
    %v90 = vpop.permute.xlu0 %89
    %93 = vset.pattern.permute.xlu0 0
    %94 = vperm.xlu0 %93, %v72
    %v95 = vpop.permute.xlu0 %94
    %98 = vset.pattern.permute.xlu0 0
    %99 = vperm.xlu0 %98, %v73
    %v100 = vpop.permute.xlu0 %99
    %103 = vset.pattern.permute.xlu0 0
    %104 = vperm.xlu0 %103, %v74
    %v105 = vpop.permute.xlu0 %104
    %108 = vset.pattern.permute.xlu0 0
    %109 = vperm.xlu0 %108, %v75
    %v110 = vpop.permute.xlu0 %109
    %113 = vset.pattern.permute.xlu0 0
    %114 = vperm.xlu0 %113, %v76
    %v115 = vpop.permute.xlu0 %114
    %vm117 = vcmask 261120
    %v119 = vsel %vm117, %v61, 0
    %v122 = vsel %vm117, %v62, 0
    %v125 = vsel %vm117, %v63, 0
    %v128 = vsel %vm117, %v64, 0
    %v131 = vsel %vm117, %v65, 0
    %v134 = vsel %vm117, %v66, 0
    %v137 = vsel %vm117, %v67, 0
    %v140 = vsel %vm117, %v68, 0
    %v143 = vsel %vm117, %v59, 0
    %v146 = vsel %vm117, %v60, 0
    %148 = vmatpush.xpose.msra.mxu0 0.0
    %149 = vmatpush.xpose.msra.mxu0 0.0
    %150 = vmatpush.xpose.msra.mxu0 0.0
    %151 = vmatpush.xpose.msra.mxu0 0.0
    %152 = vmatpush.xpose.msra.mxu0 0.0
    %153 = vmatpush.xpose.msra.mxu0 0.0
    %154 = vmatpush.xpose.msra.mxu0 0.0
    %155 = vmatpush.xpose.msra.mxu0 0.0
    %156 = vmatpush.xpose.msra.mxu0 0.0
    %157 = vmatpush.xpose.msra.mxu0 0.0
    %158 = vmatpush.xpose.msra.mxu0 0.0
    %159 = vmatpush.xpose.msra.mxu0 0.0
    %160 = vmatpush.xpose.msra.mxu0 0.0
    %161 = vmatpush.xpose.msra.mxu0 0.0
    %162 = vmatpush.xpose.msra.mxu0 %v146
    %163 = vmatpush.xpose.msra.mxu0 %v143
    %164 = vmatmul.f32.gmra.mxu0 %v119
    %v165 = vpop.f32.mrf.mxu0
    %v166 = vadd.f32 %v80, %v165
    %167 = vmatmul.f32.gmra.mxu0 %v122
    %v168 = vpop.f32.mrf.mxu0
    %v169 = vadd.f32 %v85, %v168
    %170 = vmatmul.f32.gmra.mxu0 %v125
    %v171 = vpop.f32.mrf.mxu0
    %v172 = vadd.f32 %v90, %v171
    %173 = vmatmul.f32.gmra.mxu0 %v128
    %v174 = vpop.f32.mrf.mxu0
    %v175 = vadd.f32 %v95, %v174
    %176 = vmatmul.f32.gmra.mxu0 %v131
    %v177 = vpop.f32.mrf.mxu0
    %v178 = vadd.f32 %v100, %v177
    %179 = vmatmul.f32.gmra.mxu0 %v134
    %v180 = vpop.f32.mrf.mxu0
    %v181 = vadd.f32 %v105, %v180
    %182 = vmatmul.f32.gmra.mxu0 %v137
    %v183 = vpop.f32.mrf.mxu0
    %v184 = vadd.f32 %v110, %v183
    %185 = vmatmul.f32.gmra.mxu0 %v140
    %v186 = vpop.f32.mrf.mxu0
    %v187 = vadd.f32 %v115, %v186
    %188 = vdwg.mxu0
    %v189 = vmax.f32 %v166, 0.0
    %v190 = vmax.f32 %v169, 0.0
    %v191 = vmax.f32 %v172, 0.0
    %v192 = vmax.f32 %v175, 0.0
    %v193 = vmax.f32 %v178, 0.0
    %v194 = vmax.f32 %v181, 0.0
    %v195 = vmax.f32 %v184, 0.0
    %v196 = vmax.f32 %v187, 0.0
    %v197 = vld [vmem:[%s3] sm:$0xff]
    %v198 = vld [vmem:[%s3 + $0x8] sm:$0xff]
    %v199 = vld [vmem:[%s3 + $0x10] sm:$0xff]
    %v200 = vld [vmem:[%s3 + $0x18] sm:$0xff]
    %v201 = vld [vmem:[%s4] sm:$0xff]
    %v202 = vld [vmem:[%s4 + $0x8] sm:$0xff]
    %v203 = vld [vmem:[%s4 + $0x10] sm:$0xff]
    %v204 = vld [vmem:[%s4 + $0x18] sm:$0xff]
    %206 = vset.pattern.permute.xlu0 0
    %207 = vperm.xlu0 %206, %v201
    %v208 = vpop.permute.xlu0 %207
    %211 = vset.pattern.permute.xlu0 0
    %212 = vperm.xlu0 %211, %v202
    %v213 = vpop.permute.xlu0 %212
    %216 = vset.pattern.permute.xlu0 0
    %217 = vperm.xlu0 %216, %v203
    %v218 = vpop.permute.xlu0 %217
    %221 = vset.pattern.permute.xlu0 0
    %222 = vperm.xlu0 %221, %v204
    %v223 = vpop.permute.xlu0 %222
    %vm225 = vcmask 523264
    %v227 = vsel %vm225, %v197, 0
    %v230 = vsel %vm225, %v198, 0
    %v233 = vsel %vm225, %v199, 0
    %v236 = vsel %vm225, %v200, 0
    %238 = vmatpush.msra.mxu0 0.0
    %239 = vmatpush.msra.mxu0 0.0
    %240 = vmatpush.msra.mxu0 0.0
    %241 = vmatpush.msra.mxu0 0.0
    %242 = vmatpush.msra.mxu0 0.0
    %243 = vmatpush.msra.mxu0 0.0
    %244 = vmatpush.msra.mxu0 0.0
    %245 = vmatpush.msra.mxu0 0.0
    %246 = vmatpush.msra.mxu0 %v196
    %247 = vmatpush.msra.mxu0 %v195
    %248 = vmatpush.msra.mxu0 %v194
    %249 = vmatpush.msra.mxu0 %v193
    %250 = vmatpush.msra.mxu0 %v192
    %251 = vmatpush.msra.mxu0 %v191
    %252 = vmatpush.msra.mxu0 %v190
    %253 = vmatpush.msra.mxu0 %v189
    %254 = vmatmul.f32.gmra.mxu0 %v227
    %v255 = vpop.f32.mrf.mxu0
    %v256 = vadd.f32 %v208, %v255
    %257 = vmatmul.f32.gmra.mxu0 %v230
    %v258 = vpop.f32.mrf.mxu0
    %v259 = vadd.f32 %v213, %v258
    %260 = vmatmul.f32.gmra.mxu0 %v233
    %v261 = vpop.f32.mrf.mxu0
    %v262 = vadd.f32 %v218, %v261
    %263 = vmatmul.f32.gmra.mxu0 %v236
    %v264 = vpop.f32.mrf.mxu0
    %v265 = vadd.f32 %v223, %v264
    %266 = vdwg.mxu0
    %v267 = vmax.f32 %v256, 0.0
    %v268 = vmax.f32 %v259, 0.0
    %v269 = vmax.f32 %v262, 0.0
    %v270 = vmax.f32 %v265, 0.0
    %v271 = vld [vmem:[%s5] sm:$0xff]
    %v272 = vld [vmem:[%s5 + $0x8] sm:$0xff]
    %v273 = vld [vmem:[%s6] sm:$0xff]
    %v274 = vld [vmem:[%s6 + $0x8] sm:$0xff]
    %276 = vset.pattern.permute.xlu0 0
    %277 = vperm.xlu0 %276, %v273
    %v278 = vpop.permute.xlu0 %277
    %281 = vset.pattern.permute.xlu0 0
    %282 = vperm.xlu0 %281, %v274
    %v283 = vpop.permute.xlu0 %282
    %v286 = vsel %vm117, %v271, 0
    %v289 = vsel %vm117, %v272, 0
    %291 = vmatpush.msra.mxu0 0.0
    %292 = vmatpush.msra.mxu0 0.0
    %293 = vmatpush.msra.mxu0 0.0
    %294 = vmatpush.msra.mxu0 0.0
    %295 = vmatpush.msra.mxu0 0.0
    %296 = vmatpush.msra.mxu0 0.0
    %297 = vmatpush.msra.mxu0 0.0
    %298 = vmatpush.msra.mxu0 0.0
    %299 = vmatpush.msra.mxu0 0.0
    %300 = vmatpush.msra.mxu0 0.0
    %301 = vmatpush.msra.mxu0 0.0
    %302 = vmatpush.msra.mxu0 0.0
    %303 = vmatpush.msra.mxu0 %v270
    %304 = vmatpush.msra.mxu0 %v269
    %305 = vmatpush.msra.mxu0 %v268
    %306 = vmatpush.msra.mxu0 %v267
    %307 = vmatmul.f32.gmra.mxu0 %v286
    %v308 = vpop.f32.mrf.mxu0
    %v309 = vadd.f32 %v278, %v308
    %310 = vmatmul.f32.gmra.mxu0 %v289
    %v311 = vpop.f32.mrf.mxu0
    %v312 = vadd.f32 %v283, %v311
    %313 = vdwg.mxu0
    %v314 = vmax.f32 %v309, 0.0
    %v315 = vmax.f32 %v312, 0.0
    %v316 = vld [vmem:[%s7] sm:$0xff]
    %v317 = vld [vmem:[%s8] sm:$0xff]
    %319 = vset.pattern.permute.xlu0 0
    %320 = vperm.xlu0 %319, %v317
    %v321 = vpop.permute.xlu0 %320
    %vm323 = vcmask 130048
    %v325 = vsel %vm323, %v316, 0
    %327 = vmatpush.msra.mxu0 0.0
    %328 = vmatpush.msra.mxu0 0.0
    %329 = vmatpush.msra.mxu0 0.0
    %330 = vmatpush.msra.mxu0 0.0
    %331 = vmatpush.msra.mxu0 0.0
    %332 = vmatpush.msra.mxu0 0.0
    %333 = vmatpush.msra.mxu0 0.0
    %334 = vmatpush.msra.mxu0 0.0
    %335 = vmatpush.msra.mxu0 0.0
    %336 = vmatpush.msra.mxu0 0.0
    %337 = vmatpush.msra.mxu0 0.0
    %338 = vmatpush.msra.mxu0 0.0
    %339 = vmatpush.msra.mxu0 0.0
    %340 = vmatpush.msra.mxu0 0.0
    %341 = vmatpush.msra.mxu0 %v315
    %342 = vmatpush.msra.mxu0 %v314
    %343 = vmatmul.f32.gmra.mxu0 %v325
    %v344 = vpop.f32.mrf.mxu0
    %v345 = vadd.f32 %v321, %v344
    %346 = vdwg.mxu0
    %347 = vxpose.xlu0.b32.start [1/16] %v345, 128
    %348 = vxpose.xlu0.b32.cont [2/16] 0.0, 128
    %349 = vxpose.xlu0.b32.cont [3/16] 0.0, 128
    %350 = vxpose.xlu0.b32.cont [4/16] 0.0, 128
    %351 = vxpose.xlu0.b32.cont [5/16] 0.0, 128
    %352 = vxpose.xlu0.b32.cont [6/16] 0.0, 128
    %353 = vxpose.xlu0.b32.cont [7/16] 0.0, 128
    %354 = vxpose.xlu0.b32.cont [8/16] 0.0, 128
    %355 = vxpose.xlu0.b32.cont [9/16] 0.0, 128
    %356 = vxpose.xlu0.b32.cont [10/16] 0.0, 128
    %357 = vxpose.xlu0.b32.cont [11/16] 0.0, 128
    %358 = vxpose.xlu0.b32.cont [12/16] 0.0, 128
    %359 = vxpose.xlu0.b32.cont [13/16] 0.0, 128
    %360 = vxpose.xlu0.b32.cont [14/16] 0.0, 128
    %361 = vxpose.xlu0.b32.cont [15/16] 0.0, 128
    %362 = vxpose.xlu0.b32.end [16/16] 0.0, 128
    %v363 = vpop.trf.xlu0
    %v364 = vpop.trf.xlu0
    %v365 = vpop.trf.xlu0
    %v366 = vpop.trf.xlu0
    %v367 = vpop.trf.xlu0
    %v368 = vpop.trf.xlu0
    %v369 = vpop.trf.xlu0
    %v370 = vpop.trf.xlu0
    %v371 = vpop.trf.xlu0
    %v372 = vpop.trf.xlu0
    %v373 = vpop.trf.xlu0
    %v374 = vpop.trf.xlu0
    %v375 = vpop.trf.xlu0
    %v376 = vpop.trf.xlu0
    %v377 = vpop.trf.xlu0
    %v378 = vpop.trf.xlu0
    %vm379 = vcmask 64512
    %380 = vst.msk [vmem:[%s18] sm:$0xff] %vm379, %v363
    %381 = vst.msk [vmem:[%s18 + $0x8] sm:$0xff] %vm379, %v364
    %v382 = vld [vmem:[%s9] sm:$0xff]
    %v383 = vld [vmem:[%s9 + $0x8] sm:$0xff]
    %v384 = vld [vmem:[%s10] sm:$0xff]
    %v385 = vld [vmem:[%s10 + $0x8] sm:$0xff]
    %387 = vset.pattern.permute.xlu0 0
    %388 = vperm.xlu0 %387, %v384
    %v389 = vpop.permute.xlu0 %388
    %392 = vset.pattern.permute.xlu0 0
    %393 = vperm.xlu0 %392, %v385
    %v394 = vpop.permute.xlu0 %393
    %v397 = vsel %vm323, %v382, 0
    %v400 = vsel %vm323, %v383, 0
    %402 = vmatpush.msra.mxu0 0.0
    %403 = vmatpush.msra.mxu0 0.0
    %404 = vmatpush.msra.mxu0 0.0
    %405 = vmatpush.msra.mxu0 0.0
    %406 = vmatpush.msra.mxu0 0.0
    %407 = vmatpush.msra.mxu0 0.0
    %408 = vmatpush.msra.mxu0 0.0
    %409 = vmatpush.msra.mxu0 0.0
    %410 = vmatpush.msra.mxu0 0.0
    %411 = vmatpush.msra.mxu0 0.0
    %412 = vmatpush.msra.mxu0 0.0
    %413 = vmatpush.msra.mxu0 0.0
    %414 = vmatpush.msra.mxu0 0.0
    %415 = vmatpush.msra.mxu0 0.0
    %416 = vmatpush.msra.mxu0 %v315
    %417 = vmatpush.msra.mxu0 %v314
    %418 = vmatmul.f32.gmra.mxu0 %v397
    %v419 = vpop.f32.mrf.mxu0
    %v420 = vadd.f32 %v389, %v419
    %421 = vmatmul.f32.gmra.mxu0 %v400
    %v422 = vpop.f32.mrf.mxu0
    %v423 = vadd.f32 %v394, %v422
    %424 = vdwg.mxu0
    %v425 = vmax.f32 %v420, 0.0
    %v426 = vmax.f32 %v423, 0.0
    %v427 = vld [vmem:[%s11] sm:$0xff]
    %v428 = vld [vmem:[%s11 + $0x8] sm:$0xff]
    %v429 = vld [vmem:[%s11 + $0x10] sm:$0xff]
    %v430 = vld [vmem:[%s11 + $0x18] sm:$0xff]
    %v431 = vld [vmem:[%s12] sm:$0xff]
    %v432 = vld [vmem:[%s12 + $0x8] sm:$0xff]
    %v433 = vld [vmem:[%s12 + $0x10] sm:$0xff]
    %v434 = vld [vmem:[%s12 + $0x18] sm:$0xff]
    %436 = vset.pattern.permute.xlu0 0
    %437 = vperm.xlu0 %436, %v431
    %v438 = vpop.permute.xlu0 %437
    %441 = vset.pattern.permute.xlu0 0
    %442 = vperm.xlu0 %441, %v432
    %v443 = vpop.permute.xlu0 %442
    %446 = vset.pattern.permute.xlu0 0
    %447 = vperm.xlu0 %446, %v433
    %v448 = vpop.permute.xlu0 %447
    %451 = vset.pattern.permute.xlu0 0
    %452 = vperm.xlu0 %451, %v434
    %v453 = vpop.permute.xlu0 %452
    %v456 = vsel %vm323, %v427, 0
    %v459 = vsel %vm323, %v428, 0
    %v462 = vsel %vm323, %v429, 0
    %v465 = vsel %vm323, %v430, 0
    %467 = vmatpush.msra.mxu0 0.0
    %468 = vmatpush.msra.mxu0 0.0
    %469 = vmatpush.msra.mxu0 0.0
    %470 = vmatpush.msra.mxu0 0.0
    %471 = vmatpush.msra.mxu0 0.0
    %472 = vmatpush.msra.mxu0 0.0
    %473 = vmatpush.msra.mxu0 0.0
    %474 = vmatpush.msra.mxu0 0.0
    %475 = vmatpush.msra.mxu0 0.0
    %476 = vmatpush.msra.mxu0 0.0
    %477 = vmatpush.msra.mxu0 0.0
    %478 = vmatpush.msra.mxu0 0.0
    %479 = vmatpush.msra.mxu0 0.0
    %480 = vmatpush.msra.mxu0 0.0
    %481 = vmatpush.msra.mxu0 %v426
    %482 = vmatpush.msra.mxu0 %v425
    %483 = vmatmul.f32.gmra.mxu0 %v456
    %v484 = vpop.f32.mrf.mxu0
    %v485 = vadd.f32 %v438, %v484
    %486 = vmatmul.f32.gmra.mxu0 %v459
    %v487 = vpop.f32.mrf.mxu0
    %v488 = vadd.f32 %v443, %v487
    %489 = vmatmul.f32.gmra.mxu0 %v462
    %v490 = vpop.f32.mrf.mxu0
    %v491 = vadd.f32 %v448, %v490
    %492 = vmatmul.f32.gmra.mxu0 %v465
    %v493 = vpop.f32.mrf.mxu0
    %v494 = vadd.f32 %v453, %v493
    %495 = vdwg.mxu0
    %v496 = vmax.f32 %v485, 0.0
    %v497 = vmax.f32 %v488, 0.0
    %v498 = vmax.f32 %v491, 0.0
    %v499 = vmax.f32 %v494, 0.0
    %v500 = vld [vmem:[%s13] sm:$0xff]
    %v501 = vld [vmem:[%s13 + $0x8] sm:$0xff]
    %v502 = vld [vmem:[%s13 + $0x10] sm:$0xff]
    %v503 = vld [vmem:[%s13 + $0x18] sm:$0xff]
    %v504 = vld [vmem:[%s13 + $0x20] sm:$0xff]
    %v505 = vld [vmem:[%s13 + $0x28] sm:$0xff]
    %v506 = vld [vmem:[%s13 + $0x30] sm:$0xff]
    %v507 = vld [vmem:[%s13 + $0x38] sm:$0xff]
    %v508 = vld [vmem:[%s14] sm:$0xff]
    %v509 = vld [vmem:[%s14 + $0x8] sm:$0xff]
    %v510 = vld [vmem:[%s14 + $0x10] sm:$0xff]
    %v511 = vld [vmem:[%s14 + $0x18] sm:$0xff]
    %v512 = vld [vmem:[%s14 + $0x20] sm:$0xff]
    %v513 = vld [vmem:[%s14 + $0x28] sm:$0xff]
    %v514 = vld [vmem:[%s14 + $0x30] sm:$0xff]
    %v515 = vld [vmem:[%s14 + $0x38] sm:$0xff]
    %517 = vset.pattern.permute.xlu0 0
    %518 = vperm.xlu0 %517, %v508
    %v519 = vpop.permute.xlu0 %518
    %522 = vset.pattern.permute.xlu0 0
    %523 = vperm.xlu0 %522, %v509
    %v524 = vpop.permute.xlu0 %523
    %527 = vset.pattern.permute.xlu0 0
    %528 = vperm.xlu0 %527, %v510
    %v529 = vpop.permute.xlu0 %528
    %532 = vset.pattern.permute.xlu0 0
    %533 = vperm.xlu0 %532, %v511
    %v534 = vpop.permute.xlu0 %533
    %537 = vset.pattern.permute.xlu0 0
    %538 = vperm.xlu0 %537, %v512
    %v539 = vpop.permute.xlu0 %538
    %542 = vset.pattern.permute.xlu0 0
    %543 = vperm.xlu0 %542, %v513
    %v544 = vpop.permute.xlu0 %543
    %547 = vset.pattern.permute.xlu0 0
    %548 = vperm.xlu0 %547, %v514
    %v549 = vpop.permute.xlu0 %548
    %552 = vset.pattern.permute.xlu0 0
    %553 = vperm.xlu0 %552, %v515
    %v554 = vpop.permute.xlu0 %553
    %v557 = vsel %vm117, %v500, 0
    %v560 = vsel %vm117, %v501, 0
    %v563 = vsel %vm117, %v502, 0
    %v566 = vsel %vm117, %v503, 0
    %v569 = vsel %vm117, %v504, 0
    %v572 = vsel %vm117, %v505, 0
    %v575 = vsel %vm117, %v506, 0
    %v578 = vsel %vm117, %v507, 0
    %580 = vmatpush.msra.mxu0 0.0
    %581 = vmatpush.msra.mxu0 0.0
    %582 = vmatpush.msra.mxu0 0.0
    %583 = vmatpush.msra.mxu0 0.0
    %584 = vmatpush.msra.mxu0 0.0
    %585 = vmatpush.msra.mxu0 0.0
    %586 = vmatpush.msra.mxu0 0.0
    %587 = vmatpush.msra.mxu0 0.0
    %588 = vmatpush.msra.mxu0 0.0
    %589 = vmatpush.msra.mxu0 0.0
    %590 = vmatpush.msra.mxu0 0.0
    %591 = vmatpush.msra.mxu0 0.0
    %592 = vmatpush.msra.mxu0 %v499
    %593 = vmatpush.msra.mxu0 %v498
    %594 = vmatpush.msra.mxu0 %v497
    %595 = vmatpush.msra.mxu0 %v496
    %596 = vmatmul.f32.gmra.mxu0 %v557
    %v597 = vpop.f32.mrf.mxu0
    %v598 = vadd.f32 %v519, %v597
    %599 = vmatmul.f32.gmra.mxu0 %v560
    %v600 = vpop.f32.mrf.mxu0
    %v601 = vadd.f32 %v524, %v600
    %602 = vmatmul.f32.gmra.mxu0 %v563
    %v603 = vpop.f32.mrf.mxu0
    %v604 = vadd.f32 %v529, %v603
    %605 = vmatmul.f32.gmra.mxu0 %v566
    %v606 = vpop.f32.mrf.mxu0
    %v607 = vadd.f32 %v534, %v606
    %608 = vmatmul.f32.gmra.mxu0 %v569
    %v609 = vpop.f32.mrf.mxu0
    %v610 = vadd.f32 %v539, %v609
    %611 = vmatmul.f32.gmra.mxu0 %v572
    %v612 = vpop.f32.mrf.mxu0
    %v613 = vadd.f32 %v544, %v612
    %614 = vmatmul.f32.gmra.mxu0 %v575
    %v615 = vpop.f32.mrf.mxu0
    %v616 = vadd.f32 %v549, %v615
    %617 = vmatmul.f32.gmra.mxu0 %v578
    %v618 = vpop.f32.mrf.mxu0
    %v619 = vadd.f32 %v554, %v618
    %620 = vdwg.mxu0
    %v621 = vmax.f32 %v598, 0.0
    %v622 = vmax.f32 %v601, 0.0
    %v623 = vmax.f32 %v604, 0.0
    %v624 = vmax.f32 %v607, 0.0
    %v625 = vmax.f32 %v610, 0.0
    %v626 = vmax.f32 %v613, 0.0
    %v627 = vmax.f32 %v616, 0.0
    %v628 = vmax.f32 %v619, 0.0
    %v629 = vld [vmem:[%s15] sm:$0xff]
    %v630 = vld [vmem:[%s15 + $0x8] sm:$0xff]
    %v631 = vld [vmem:[%s15 + $0x10] sm:$0xff]
    %v632 = vld [vmem:[%s15 + $0x18] sm:$0xff]
    %v633 = vld [vmem:[%s16] sm:$0xff]
    %v634 = vld [vmem:[%s16 + $0x8] sm:$0xff]
    %v635 = vld [vmem:[%s16 + $0x10] sm:$0xff]
    %v636 = vld [vmem:[%s16 + $0x18] sm:$0xff]
    %638 = vset.pattern.permute.xlu0 0
    %639 = vperm.xlu0 %638, %v633
    %v640 = vpop.permute.xlu0 %639
    %643 = vset.pattern.permute.xlu0 0
    %644 = vperm.xlu0 %643, %v634
    %v645 = vpop.permute.xlu0 %644
    %648 = vset.pattern.permute.xlu0 0
    %649 = vperm.xlu0 %648, %v635
    %v650 = vpop.permute.xlu0 %649
    %653 = vset.pattern.permute.xlu0 0
    %654 = vperm.xlu0 %653, %v636
    %v655 = vpop.permute.xlu0 %654
    %v658 = vsel %vm225, %v629, 0
    %v661 = vsel %vm225, %v630, 0
    %v664 = vsel %vm225, %v631, 0
    %v667 = vsel %vm225, %v632, 0
    %669 = vmatpush.msra.mxu0 0.0
    %670 = vmatpush.msra.mxu0 0.0
    %671 = vmatpush.msra.mxu0 0.0
    %672 = vmatpush.msra.mxu0 0.0
    %673 = vmatpush.msra.mxu0 0.0
    %674 = vmatpush.msra.mxu0 0.0
    %675 = vmatpush.msra.mxu0 0.0
    %676 = vmatpush.msra.mxu0 0.0
    %677 = vmatpush.msra.mxu0 %v628
    %678 = vmatpush.msra.mxu0 %v627
    %679 = vmatpush.msra.mxu0 %v626
    %680 = vmatpush.msra.mxu0 %v625
    %681 = vmatpush.msra.mxu0 %v624
    %682 = vmatpush.msra.mxu0 %v623
    %683 = vmatpush.msra.mxu0 %v622
    %684 = vmatpush.msra.mxu0 %v621
    %685 = vmatmul.f32.gmra.mxu0 %v658
    %v686 = vpop.f32.mrf.mxu0
    %v687 = vadd.f32 %v640, %v686
    %688 = vmatmul.f32.gmra.mxu0 %v661
    %v689 = vpop.f32.mrf.mxu0
    %v690 = vadd.f32 %v645, %v689
    %691 = vmatmul.f32.gmra.mxu0 %v664
    %v692 = vpop.f32.mrf.mxu0
    %v693 = vadd.f32 %v650, %v692
    %694 = vmatmul.f32.gmra.mxu0 %v667
    %v695 = vpop.f32.mrf.mxu0
    %v696 = vadd.f32 %v655, %v695
    %697 = vdwg.mxu0
    %698 = vxpose.xlu0.b32.start [1/16] %v687, 128
    %699 = vxpose.xlu0.b32.cont [2/16] %v690, 128
    %700 = vxpose.xlu0.b32.cont [3/16] %v693, 128
    %701 = vxpose.xlu0.b32.cont [4/16] %v696, 128
    %702 = vxpose.xlu0.b32.cont [5/16] 0.0, 128
    %703 = vxpose.xlu0.b32.cont [6/16] 0.0, 128
    %704 = vxpose.xlu0.b32.cont [7/16] 0.0, 128
    %705 = vxpose.xlu0.b32.cont [8/16] 0.0, 128
    %706 = vxpose.xlu0.b32.cont [9/16] 0.0, 128
    %707 = vxpose.xlu0.b32.cont [10/16] 0.0, 128
    %708 = vxpose.xlu0.b32.cont [11/16] 0.0, 128
    %709 = vxpose.xlu0.b32.cont [12/16] 0.0, 128
    %710 = vxpose.xlu0.b32.cont [13/16] 0.0, 128
    %711 = vxpose.xlu0.b32.cont [14/16] 0.0, 128
    %712 = vxpose.xlu0.b32.cont [15/16] 0.0, 128
    %713 = vxpose.xlu0.b32.end [16/16] 0.0, 128
    %v714 = vpop.trf.xlu0
    %v715 = vpop.trf.xlu0
    %v716 = vpop.trf.xlu0
    %v717 = vpop.trf.xlu0
    %v718 = vpop.trf.xlu0
    %v719 = vpop.trf.xlu0
    %v720 = vpop.trf.xlu0
    %v721 = vpop.trf.xlu0
    %v722 = vpop.trf.xlu0
    %v723 = vpop.trf.xlu0
    %v724 = vpop.trf.xlu0
    %v725 = vpop.trf.xlu0
    %v726 = vpop.trf.xlu0
    %v727 = vpop.trf.xlu0
    %v728 = vpop.trf.xlu0
    %v729 = vpop.trf.xlu0
    %730 = vst.msk [vmem:[#allocation2] sm:$0xff] %vm117, %v714
    %731 = vst.msk [vmem:[#allocation2 + $0x8] sm:$0xff] %vm117, %v715
    // Predicated region
    $region70: #{tpu_custom_call.1} parent=1 // pred_check
      _
    $region71: #{tpu_custom_call.1} parent=1 // pred_check_branch
      %733 = sbr.rel (0) target = $region73
    $region72: #{tpu_custom_call.1} parent=1 // pred_region
      %735 = vsyncadd [#allocation3], 0
      %s736 = sshll.u32 [#allocation2], 4
      %s737 = int_to_ptr.vmem [resolvable:$true] %s736
      %s738 = sshll.u32 %s17, 4
      %s739 = int_to_ptr.hbm [resolvable:$true] %s738
      %744 = dma.vmem_to_hbm [thread:$0]  %s737, 256, %s739, [#allocation3], 128, 128, 8
    $region73: #{tpu_custom_call.1} parent=1 // pred_fallthru
      _
    // Predicated region
    $region74: #{tpu_custom_call.1} parent=1 // pred_check
      _
    $region75: #{tpu_custom_call.1} parent=1 // pred_check_branch
      %746 = sbr.rel (0) target = $region77
    $region76: #{tpu_custom_call.1} parent=1 // pred_region
      _
    $region77: #{tpu_custom_call.1} parent=1 // pred_fallthru
      _
    // Predicated region
    $region78: #{tpu_custom_call.1} parent=1 // pred_check
      _
    $region79: #{tpu_custom_call.1} parent=1 // pred_check_branch
      %748 = sbr.rel (0) target = $region81
    $region80: #{tpu_custom_call.1} parent=1 // pred_region
      %750 = dma.done [#allocation3], 256
    $region81: #{tpu_custom_call.1} parent=1 // pred_fallthru
      _
    // Predicated region
    $region82: #{tpu_custom_call.1} parent=1 // pred_check
      _
    $region83: #{tpu_custom_call.1} parent=1 // pred_check_branch
      %752 = sbr.rel (0) target = $region85
    $region84: #{tpu_custom_call.1} parent=1 // pred_region
      _
    $region85: #{tpu_custom_call.1} parent=1 // pred_fallthru
      _
    %753 = vsyncpa [#allocation3], 1

</llo_original>
